<compile_context>
chip_gen: v7x
topology: tpu7x:2x2x1
jax: 0.10.0
libtpu: 0.0.40
codegen_flags: <defaults>
</compile_context>

<pallas_src>
import jax
import jax.numpy as jnp
from jax.experimental import pallas as pl
from jax.experimental.pallas import tpu as pltpu


def _round_up(n: int, m: int) -> int:
    return ((n + m - 1) // m) * m


def _actor_kernel(scale_ref, x_ref, w1_ref, b1_ref, w2_ref, b2_ref,
                  w3_ref, b3_ref, o_ref):
    scale = scale_ref[0, 0]                                   # SMEM scalar
    x = x_ref[...]                                            # (TB, S) bf16

    h1 = jnp.dot(x, w1_ref[...], preferred_element_type=jnp.float32) + b1_ref[...]
    h1 = jnp.maximum(h1, 0.0).astype(jnp.bfloat16)            # relu in f32 -> bf16

    h2 = jnp.dot(h1, w2_ref[...], preferred_element_type=jnp.float32) + b2_ref[...]
    h2 = jnp.maximum(h2, 0.0).astype(jnp.bfloat16)            # relu in f32 -> bf16

    h3 = jnp.dot(h2, w3_ref[...], preferred_element_type=jnp.float32) + b3_ref[...]
    o_ref[...] = jnp.tanh(h3) * scale                         # f32 tanh * max_action


def _vmem_estimate(tb, S, H1, H2, A):
    """Rough per-step VMEM budget (bytes) for vmem_limit_bytes."""
    weights = 2 * (S * H1 + H1 * H2 + H2 * A) + 4 * (H1 + H2 + A)  # Buffered(1), bf16 W / f32 b
    tiles = 2 * (tb * S * 2) + 2 * (tb * A * 4)                    # double-buffered x / out tiles
    temps = tb * (H1 + H2) * (4 + 2) + 2 * tb * A * 4              # f32 + bf16 h1/h2, h3 + tanh
    total = int((weights + tiles + temps) * 1.5) + (4 << 20)       # 50% + 4 MiB headroom
    return min(max(total, 32 << 20), 64 << 20)                     # >= v6e default, <= v7x physical


def actor_forward(x, params, max_action, action_dim, *, max_tb=1024):
    """x: (B, state_dim) float32.  params: bf16 weights / f32 biases (padded outs)."""
    B, S = x.shape
    assert params["w1"].shape[0] == S, "w1 fan_in must equal state_dim"
    H1 = params["w1"].shape[1]
    H2 = params["w2"].shape[1]
    A_pad = params["w3"].shape[1]

    # --- batch tile selection -------------------------------------------------
    # Minimize B_pad - B waste; keep tb a multiple of 16 (bf16 sublane pack);
    # ensure >= 2 grid steps for mid/large batches (v7x megacore split);
    # cap tb at max_tb=1024 so f32 h1/h2 temporaries fit v5e's 16 MiB scoped VMEM.
    n_tiles = pl.cdiv(B, max_tb)
    if B >= 256 and n_tiles < 2:
        n_tiles = 2
    tb = _round_up(pl.cdiv(B, n_tiles), 16)
    B_pad = n_tiles * tb

    # --- input: bf16 at natural feature width, batch-padded only if needed ----
    x_bf = x.astype(jnp.bfloat16)
    if B_pad != B:
        x_bf = jnp.zeros((B_pad, S), jnp.bfloat16).at[:B].set(x_bf)

    scale = jnp.full((1, 1), max_action, dtype=jnp.float32)

    const = lambda i: (0, 0)
    resident = dict(pipeline_mode=pl.Buffered(1))   # single-buffered VMEM-resident weights

    out = pl.pallas_call(
        _actor_kernel,
        out_shape=jax.ShapeDtypeStruct((B_pad, A_pad), jnp.float32),
        grid=(n_tiles,),
        in_specs=[
            # scalar max_action in SMEM
            pl.BlockSpec((1, 1), const, memory_space=pltpu.MemorySpace.SMEM),
            # streaming input tile (last dim == full array dim, so S need not be 128-aligned)
            pl.BlockSpec((tb, S), lambda i: (i, 0)),
            # weights / biases: constant block index -> VMEM-resident, single-buffered
            pl.BlockSpec((S, H1), const, **resident),
            pl.BlockSpec((1, H1), const, **resident),
            pl.BlockSpec((H1, H2), const, **resident),
            pl.BlockSpec((1, H2), const, **resident),
            pl.BlockSpec((H2, A_pad), const, **resident),
            pl.BlockSpec((1, A_pad), const, **resident),
        ],
        out_specs=pl.BlockSpec((tb, A_pad), lambda i: (i, 0)),
        compiler_params=pltpu.CompilerParams(
            dimension_semantics=("parallel",),
            vmem_limit_bytes=_vmem_estimate(tb, S, H1, H2, A_pad)),
    )(scale, x_bf,
      params["w1"], params["b1"],
      params["w2"], params["b2"],
      params["w3"], params["b3"])

    return out[:B, :action_dim]


def init_actor_params(key, state_dim, action_dim, h1=400, h2=300):
    """Deterministic synthetic params.

    PyTorch Linear semantics y = x @ W.T + b, so W is stored pre-transposed as
    (fan_in, fan_out).  Output dims are zero-padded to lane multiples
    (400 -> 512, 300 -> 384, action_dim -> 128); padded weight columns and
    padded bias entries are ZERO (exact through relu/tanh).  fan_in of w1 is
    the natural state_dim (no 128-padding of the input stream).
    """
    H1 = _round_up(h1, 128)        # 400 -> 512
    H2 = _round_up(h2, 128)        # 300 -> 384
    A_pad = _round_up(action_dim, 128)

    keys = jax.random.split(key, 6)

    def lin(kw, kb, fan_in, fan_out, fan_in_pad, fan_out_pad):
        bound = 1.0 / (fan_in ** 0.5)                     # PyTorch default init range
        w = jax.random.uniform(kw, (fan_in, fan_out), jnp.float32, -bound, bound)
        b = jax.random.uniform(kb, (fan_out,), jnp.float32, -bound, bound)
        w_p = jnp.zeros((fan_in_pad, fan_out_pad), jnp.float32)
        w_p = w_p.at[:fan_in, :fan_out].set(w).astype(jnp.bfloat16)
        b_p = jnp.zeros((1, fan_out_pad), jnp.float32).at[0, :fan_out].set(b)
        return w_p, b_p

    w1, b1 = lin(keys[0], keys[1], state_dim, h1, state_dim, H1)
    w2, b2 = lin(keys[2], keys[3], h1, h2, H1, H2)
    w3, b3 = lin(keys[4], keys[5], h2, action_dim, H2, A_pad)
    return {"w1": w1, "b1": b1, "w2": w2, "b2": b2, "w3": w3, "b3": b3}


if __name__ == "__main__":
    key = jax.random.PRNGKey(0)
    kx, kp = jax.random.split(key)

    batch = 2
    state_dim = 32
    action_dim = 4
    max_action = 2.0

    x = jax.random.normal(kx, (batch, state_dim), dtype=jnp.float32)
    params = init_actor_params(kp, state_dim, action_dim)

    out = actor_forward(x, params, max_action, action_dim)
    out = jax.block_until_ready(out)
    assert out.shape == (batch, action_dim)

    # Pure-JAX reference with the same bf16-weight / f32-accumulate recipe.
    # TODO(synk): a true f32-weight PyTorch Actor differs at ~1e-2 near tanh
    # saturation; mixed precision assumed acceptable per spec.
    xb = x.astype(jnp.bfloat16)
    h1 = jnp.maximum(
        jnp.dot(xb, params["w1"], preferred_element_type=jnp.float32)
        + params["b1"], 0.0).astype(jnp.bfloat16)
    h2 = jnp.maximum(
        jnp.dot(h1, params["w2"], preferred_element_type=jnp.float32)
        + params["b2"], 0.0).astype(jnp.bfloat16)
    ref = (jnp.tanh(
        jnp.dot(h2, params["w3"], preferred_element_type=jnp.float32)
        + params["b3"]) * max_action)[:, :action_dim]

    assert jnp.allclose(out, ref, atol=5e-3, rtol=5e-3), "mismatch vs reference"

    print("KERNEL_OK")
</pallas_src>

<mosaic_0001>
module attributes {stable_mosaic.version = 11 : i64} {
  func.func @_actor_kernel(%arg0: i32, %arg1: memref<1x1xf32, #tpu.memory_space<smem>>, %arg2: memref<16x32xbf16, #tpu.memory_space<vmem>>, %arg3: memref<32x512xbf16, #tpu.memory_space<vmem>>, %arg4: memref<1x512xf32, #tpu.memory_space<vmem>>, %arg5: memref<512x384xbf16, #tpu.memory_space<vmem>>, %arg6: memref<1x384xf32, #tpu.memory_space<vmem>>, %arg7: memref<384x128xbf16, #tpu.memory_space<vmem>>, %arg8: memref<1x128xf32, #tpu.memory_space<vmem>>, %arg9: memref<16x128xf32, #tpu.memory_space<vmem>>) attributes {dimension_semantics = [#tpu.dimension_semantics<parallel>], iteration_bounds = array<i64: 1>, scalar_prefetch = 0 : i64, scratch_operands = 0 : i64, tpu.core_type = #tpu.core_type<tc>, window_params = [{transform_indices = @transform_0, window_bounds = array<i64: 1, 1>}, {transform_indices = @transform_1, window_bounds = array<i64: 16, 32>}, {pipeline_mode = #tpu.pipeline_mode<synchronous>, transform_indices = @transform_2, window_bounds = array<i64: 32, 512>}, {pipeline_mode = #tpu.pipeline_mode<synchronous>, transform_indices = @transform_3, window_bounds = array<i64: 1, 512>}, {pipeline_mode = #tpu.pipeline_mode<synchronous>, transform_indices = @transform_4, window_bounds = array<i64: 512, 384>}, {pipeline_mode = #tpu.pipeline_mode<synchronous>, transform_indices = @transform_5, window_bounds = array<i64: 1, 384>}, {pipeline_mode = #tpu.pipeline_mode<synchronous>, transform_indices = @transform_6, window_bounds = array<i64: 384, 128>}, {pipeline_mode = #tpu.pipeline_mode<synchronous>, transform_indices = @transform_7, window_bounds = array<i64: 1, 128>}, {transform_indices = @transform_8, window_bounds = array<i64: 16, 128>}]} {
    %c0 = arith.constant 0 : index
    %c0_0 = arith.constant 0 : index
    %0 = memref.load %arg1[%c0, %c0_0] : memref<1x1xf32, #tpu.memory_space<smem>>
    %c0_1 = arith.constant 0 : index
    %c0_2 = arith.constant 0 : index
    %1 = vector.load %arg2[%c0_1, %c0_2] : memref<16x32xbf16, #tpu.memory_space<vmem>>, vector<16x32xbf16>
    %c0_3 = arith.constant 0 : index
    %c0_4 = arith.constant 0 : index
    %2 = vector.load %arg3[%c0_3, %c0_4] : memref<32x512xbf16, #tpu.memory_space<vmem>>, vector<32x512xbf16>
    %cst = arith.constant dense<0.000000e+00> : vector<16x512xf32>
    %3 = tpu.matmul %1, %2, %cst {dimension_numbers = #tpu.dot_dimension_numbers<[1], [0], [0], [1], [0, 0, 1, 1], [], []>} : vector<16x32xbf16>, vector<32x512xbf16>, vector<16x512xf32> -> vector<16x512xf32>
    %c0_5 = arith.constant 0 : index
    %c0_6 = arith.constant 0 : index
    %4 = vector.load %arg4[%c0_5, %c0_6] : memref<1x512xf32, #tpu.memory_space<vmem>>, vector<1x512xf32>
    %5 = vector.broadcast %4 : vector<1x512xf32> to vector<16x512xf32>
    %6 = arith.addf %3, %5 : vector<16x512xf32>
    %cst_7 = arith.constant 0.000000e+00 : f32
    %7 = vector.broadcast %cst_7 : f32 to vector<16x512xf32>
    %8 = arith.maximumf %6, %7 : vector<16x512xf32>
    %9 = arith.truncf %8 : vector<16x512xf32> to vector<16x512xbf16>
    %c0_8 = arith.constant 0 : index
    %c0_9 = arith.constant 0 : index
    %10 = vector.load %arg5[%c0_8, %c0_9] : memref<512x384xbf16, #tpu.memory_space<vmem>>, vector<512x384xbf16>
    %cst_10 = arith.constant dense<0.000000e+00> : vector<16x384xf32>
    %11 = tpu.matmul %9, %10, %cst_10 {dimension_numbers = #tpu.dot_dimension_numbers<[1], [0], [0], [1], [0, 0, 1, 1], [], []>} : vector<16x512xbf16>, vector<512x384xbf16>, vector<16x384xf32> -> vector<16x384xf32>
    %c0_11 = arith.constant 0 : index
    %c0_12 = arith.constant 0 : index
    %12 = vector.load %arg6[%c0_11, %c0_12] : memref<1x384xf32, #tpu.memory_space<vmem>>, vector<1x384xf32>
    %13 = vector.broadcast %12 : vector<1x384xf32> to vector<16x384xf32>
    %14 = arith.addf %11, %13 : vector<16x384xf32>
    %cst_13 = arith.constant 0.000000e+00 : f32
    %15 = vector.broadcast %cst_13 : f32 to vector<16x384xf32>
    %16 = arith.maximumf %14, %15 : vector<16x384xf32>
    %17 = arith.truncf %16 : vector<16x384xf32> to vector<16x384xbf16>
    %c0_14 = arith.constant 0 : index
    %c0_15 = arith.constant 0 : index
    %18 = vector.load %arg7[%c0_14, %c0_15] : memref<384x128xbf16, #tpu.memory_space<vmem>>, vector<384x128xbf16>
    %cst_16 = arith.constant dense<0.000000e+00> : vector<16x128xf32>
    %19 = tpu.matmul %17, %18, %cst_16 {dimension_numbers = #tpu.dot_dimension_numbers<[1], [0], [0], [1], [0, 0, 1, 1], [], []>} : vector<16x384xbf16>, vector<384x128xbf16>, vector<16x128xf32> -> vector<16x128xf32>
    %c0_17 = arith.constant 0 : index
    %c0_18 = arith.constant 0 : index
    %20 = vector.load %arg8[%c0_17, %c0_18] : memref<1x128xf32, #tpu.memory_space<vmem>>, vector<1x128xf32>
    %21 = vector.broadcast %20 : vector<1x128xf32> to vector<16x128xf32>
    %22 = arith.addf %19, %21 : vector<16x128xf32>
    %23 = math.tanh %22 : vector<16x128xf32>
    %24 = vector.broadcast %0 : f32 to vector<16x128xf32>
    %25 = arith.mulf %23, %24 : vector<16x128xf32>
    %c0_19 = arith.constant 0 : index
    %c0_20 = arith.constant 0 : index
    %26 = vector.load %arg9[%c0_19, %c0_20] : memref<16x128xf32, #tpu.memory_space<vmem>>, vector<16x128xf32>
    tpu.vector_store %arg9[%c0_19, %c0_20], %25 {strides = array<i32>} : memref<16x128xf32, #tpu.memory_space<vmem>>, vector<16x128xf32>,
    return
  }
  func.func @transform_0(%arg0: i32) -> (i32, i32) {
    %c0_i32 = arith.constant 0 : i32
    %c0_i32_0 = arith.constant 0 : i32
    %c0_i32_1 = arith.constant 0 : i32
    return %c0_i32, %c0_i32_0 : i32, i32
  }
  func.func @transform_1(%arg0: i32) -> (i32, i32) {
    %c0_i32 = arith.constant 0 : i32
    %c0_i32_0 = arith.constant 0 : i32
    return %arg0, %c0_i32 : i32, i32
  }
  func.func @transform_2(%arg0: i32) -> (i32, i32) {
    %c0_i32 = arith.constant 0 : i32
    %c0_i32_0 = arith.constant 0 : i32
    %c0_i32_1 = arith.constant 0 : i32
    return %c0_i32, %c0_i32_0 : i32, i32
  }
  func.func @transform_3(%arg0: i32) -> (i32, i32) {
    %c0_i32 = arith.constant 0 : i32
    %c0_i32_0 = arith.constant 0 : i32
    %c0_i32_1 = arith.constant 0 : i32
    return %c0_i32, %c0_i32_0 : i32, i32
  }
  func.func @transform_4(%arg0: i32) -> (i32, i32) {
    %c0_i32 = arith.constant 0 : i32
    %c0_i32_0 = arith.constant 0 : i32
    %c0_i32_1 = arith.constant 0 : i32
    return %c0_i32, %c0_i32_0 : i32, i32
  }
  func.func @transform_5(%arg0: i32) -> (i32, i32) {
    %c0_i32 = arith.constant 0 : i32
    %c0_i32_0 = arith.constant 0 : i32
    %c0_i32_1 = arith.constant 0 : i32
    return %c0_i32, %c0_i32_0 : i32, i32
  }
  func.func @transform_6(%arg0: i32) -> (i32, i32) {
    %c0_i32 = arith.constant 0 : i32
    %c0_i32_0 = arith.constant 0 : i32
    %c0_i32_1 = arith.constant 0 : i32
    return %c0_i32, %c0_i32_0 : i32, i32
  }
  func.func @transform_7(%arg0: i32) -> (i32, i32) {
    %c0_i32 = arith.constant 0 : i32
    %c0_i32_0 = arith.constant 0 : i32
    %c0_i32_1 = arith.constant 0 : i32
    return %c0_i32, %c0_i32_0 : i32, i32
  }
  func.func @transform_8(%arg0: i32) -> (i32, i32) {
    %c0_i32 = arith.constant 0 : i32
    %c0_i32_0 = arith.constant 0 : i32
    return %arg0, %c0_i32 : i32, i32
  }
}

</mosaic_0001>

<llo_original>
// kernel: tpu_custom_call.1
$region0: #{tpu_custom_call.1}
  #allocation0 [shape = 'u32[]', space=smem, size = 0x4, offset = 0x4, fixed_abs, tag = 'smem constant byte address 0x4 - core index']
  #allocation1 [shape = 'u32[144,128]{1,0:T(1,128)}', space=vmem, size = 0x12000, scoped, tag = 'internal scratch']
  #allocation2 [shape = 'f32[1,1]{1,0:T(1,128)S(6)}', space=smem, size = 0x200, scoped, tag = 'scoped memory for tpu_custom_call.1']
  %s0 = inlined_call_operand.<no memory space> [shape: f32[1,1], index: 0, kind: input, shape index: {}]
  %s1 = inlined_call_operand.hbm [shape: bf16[16,32], index: 1, kind: input, shape index: {}]
  %s2 = inlined_call_operand.hbm [shape: bf16[32,512], index: 2, kind: input, shape index: {}]
  %s3 = inlined_call_operand.vmem [shape: f32[1,512], index: 3, kind: input, shape index: {}]
  %s4 = inlined_call_operand.hbm [shape: bf16[512,384], index: 4, kind: input, shape index: {}]
  %s5 = inlined_call_operand.vmem [shape: f32[1,384], index: 5, kind: input, shape index: {}]
  %s6 = inlined_call_operand.hbm [shape: bf16[384,128], index: 6, kind: input, shape index: {}]
  %s7 = inlined_call_operand.vmem [shape: f32[1,128], index: 7, kind: input, shape index: {}]
  %s8 = inlined_call_operand.hbm [shape: f32[16,128], index: 8, kind: output, shape index: {}]
  %s9 = sld [smem:[#allocation0]]
  $region58: #{tpu_custom_call.1} parent=0
    _
  %s11 = ssub.s32 1, %s9
  %s12 = scalar_select 0, %s11, %s9
  %13 = sst [smem:[#allocation2]] %s0
  $region1: #{tpu_custom_call.1} parent=0
    #allocation3 [shape = 'u8[4096]{0}', space=vmem, size = 0x1000, scoped, tag = 'input window, operand 1, single buffered']
    #allocation4 [shape = 's32[1]{0}', space=sflag, size = 0x4, scoped, tag = 'scoped memory for tpu_custom_call.1']
    #allocation5 [shape = 's32[1]{0}', space=sflag, size = 0x4, scoped, tag = 'scoped memory for tpu_custom_call.1']
    #allocation6 [shape = 'u8[32768]{0}', space=vmem, size = 0x8000, scoped, tag = 'input window, operand 2, single buffered']
    #allocation7 [shape = 's32[1]{0}', space=sflag, size = 0x4, scoped, tag = 'scoped memory for tpu_custom_call.1']
    #allocation8 [shape = 'u8[393216]{0}', space=vmem, size = 0x60000, scoped, tag = 'input window, operand 4, single buffered']
    #allocation9 [shape = 'u8[98304]{0}', space=vmem, size = 0x18000, scoped, tag = 'input window, operand 6, single buffered']
    #allocation10 [shape = 's32[1]{0}', space=sflag, size = 0x4, scoped, tag = 'scoped memory for tpu_custom_call.1']
    #allocation11 [shape = 'u8[8192]{0}', space=vmem, size = 0x2000, scoped, tag = 'output window, operand 0, single buffered']
    %14 = vsyncpa [#allocation4], 0
    %15 = vsyncpa [#allocation7], 0
    %16 = vsyncpa [#allocation10], 0
    %17 = vsyncpa [#allocation5], 0
    // Predicated region
    $region2: #{tpu_custom_call.1} parent=1 // pred_check
      _
    $region3: #{tpu_custom_call.1} parent=1 // pred_check_branch
      %19 = sbr.rel (0) target = $region5
    $region4: #{tpu_custom_call.1} parent=1 // pred_region
      _
    $region5: #{tpu_custom_call.1} parent=1 // pred_fallthru
      _
    // Predicated region
    $region6: #{tpu_custom_call.1} parent=1 // pred_check
      _
    $region7: #{tpu_custom_call.1} parent=1 // pred_check_branch
      %21 = sbr.rel (0) target = $region9
    $region8: #{tpu_custom_call.1} parent=1 // pred_region
      %s23 = ssub.s32 128, 128
      %24 = vsyncadd [#allocation4], %s23
      %s25 = sshll.u32 [#allocation3], 4
      %s26 = int_to_ptr.vmem [resolvable:$true] %s25
      %31 = dma.hbm_to_vmem [thread:$0]  %s1, 128, %s26, [#allocation4], 64, 64, 4
    $region9: #{tpu_custom_call.1} parent=1 // pred_fallthru
      _
    // Predicated region
    $region10: #{tpu_custom_call.1} parent=1 // pred_check
      _
    $region11: #{tpu_custom_call.1} parent=1 // pred_check_branch
      %33 = sbr.rel (0) target = $region13
    $region12: #{tpu_custom_call.1} parent=1 // pred_region
      %s35 = ssub.s32 1024, 1024
      %36 = vsyncadd [#allocation7], %s35
      %s37 = sshll.u32 [#allocation6], 4
      %s38 = int_to_ptr.vmem [resolvable:$true] %s37
      %43 = dma.hbm_to_vmem [thread:$0]  %s2, 1024, %s38, [#allocation7], 256, 256, 16
    $region13: #{tpu_custom_call.1} parent=1 // pred_fallthru
      _
    // Predicated region
    $region14: #{tpu_custom_call.1} parent=1 // pred_check
      _
    $region15: #{tpu_custom_call.1} parent=1 // pred_check_branch
      %45 = sbr.rel (0) target = $region17
    $region16: #{tpu_custom_call.1} parent=1 // pred_region
      _
    $region17: #{tpu_custom_call.1} parent=1 // pred_fallthru
      _
    // Predicated region
    $region18: #{tpu_custom_call.1} parent=1 // pred_check
      _
    $region19: #{tpu_custom_call.1} parent=1 // pred_check_branch
      %47 = sbr.rel (0) target = $region21
    $region20: #{tpu_custom_call.1} parent=1 // pred_region
      %s49 = ssub.s32 12288, 12288
      %50 = vsyncadd [#allocation7], %s49
      %s51 = sshll.u32 [#allocation8], 4
      %s52 = int_to_ptr.vmem [resolvable:$true] %s51
      %57 = dma.hbm_to_vmem [thread:$0]  %s4, 12288, %s52, [#allocation7], 192, 192, 12
    $region21: #{tpu_custom_call.1} parent=1 // pred_fallthru
      _
    // Predicated region
    $region22: #{tpu_custom_call.1} parent=1 // pred_check
      _
    $region23: #{tpu_custom_call.1} parent=1 // pred_check_branch
      %59 = sbr.rel (0) target = $region25
    $region24: #{tpu_custom_call.1} parent=1 // pred_region
      _
    $region25: #{tpu_custom_call.1} parent=1 // pred_fallthru
      _
    // Predicated region
    $region26: #{tpu_custom_call.1} parent=1 // pred_check
      _
    $region27: #{tpu_custom_call.1} parent=1 // pred_check_branch
      %61 = sbr.rel (0) target = $region29
    $region28: #{tpu_custom_call.1} parent=1 // pred_region
      %s63 = ssub.s32 3072, 3072
      %64 = vsyncadd [#allocation10], %s63
      %s65 = sshll.u32 [#allocation9], 4
      %s66 = int_to_ptr.vmem [resolvable:$true] %s65
      %71 = dma.hbm_to_vmem [thread:$0]  %s6, 3072, %s66, [#allocation10], 64, 64, 4
    $region29: #{tpu_custom_call.1} parent=1 // pred_fallthru
      _
    // Predicated region
    $region30: #{tpu_custom_call.1} parent=1 // pred_check
      _
    $region31: #{tpu_custom_call.1} parent=1 // pred_check_branch
      %73 = sbr.rel (0) target = $region33
    $region32: #{tpu_custom_call.1} parent=1 // pred_region
      _
    $region33: #{tpu_custom_call.1} parent=1 // pred_fallthru
      _
    // Predicated region
    $region34: #{tpu_custom_call.1} parent=1 // pred_check
      _
    $region35: #{tpu_custom_call.1} parent=1 // pred_check_branch
      %75 = sbr.rel (0) target = $region37
    $region36: #{tpu_custom_call.1} parent=1 // pred_region
      %76 = dma.done [#allocation4], 128
    $region37: #{tpu_custom_call.1} parent=1 // pred_fallthru
      _
    // Predicated region
    $region38: #{tpu_custom_call.1} parent=1 // pred_check
      _
    $region39: #{tpu_custom_call.1} parent=1 // pred_check_branch
      %78 = sbr.rel (0) target = $region41
    $region40: #{tpu_custom_call.1} parent=1 // pred_region
      %79 = dma.done [#allocation7], 1024
    $region41: #{tpu_custom_call.1} parent=1 // pred_fallthru
      _
    // Predicated region
    $region42: #{tpu_custom_call.1} parent=1 // pred_check
      _
    $region43: #{tpu_custom_call.1} parent=1 // pred_check_branch
      %81 = sbr.rel (0) target = $region45
    $region44: #{tpu_custom_call.1} parent=1 // pred_region
      %82 = dma.done [#allocation7], 12288
    $region45: #{tpu_custom_call.1} parent=1 // pred_fallthru
      _
    // Predicated region
    $region46: #{tpu_custom_call.1} parent=1 // pred_check
      _
    $region47: #{tpu_custom_call.1} parent=1 // pred_check_branch
      %84 = sbr.rel (0) target = $region49
    $region48: #{tpu_custom_call.1} parent=1 // pred_region
      %85 = dma.done [#allocation10], 3072
    $region49: #{tpu_custom_call.1} parent=1 // pred_fallthru
      _
    %s87 = sld [smem:[#allocation2]]
    %v88 = vld [vmem:[#allocation3] sm:$0xf]
    %v89 = vld [vmem:[#allocation3 + $0x4] sm:$0xf]
    %v90 = vld [vmem:[#allocation6] sm:$0xff]
    %v91 = vld [vmem:[#allocation6 + $0x8] sm:$0xff]
    %v92 = vld [vmem:[#allocation6 + $0x10] sm:$0xff]
    %v93 = vld [vmem:[#allocation6 + $0x18] sm:$0xff]
    %v94 = vld [vmem:[#allocation6 + $0x20] sm:$0xff]
    %v95 = vld [vmem:[#allocation6 + $0x28] sm:$0xff]
    %v96 = vld [vmem:[#allocation6 + $0x30] sm:$0xff]
    %v97 = vld [vmem:[#allocation6 + $0x38] sm:$0xff]
    %v98 = vld [vmem:[%s3] sm:$0xf]
    %v100 = vlaneseq
    %v101 = vshrl.u32 %v100, 7
    %v102 = vsub.s32 0, %v101
    %v103 = vrot.slane %v98, %v102
    %v104 = vlaneseq
    %v105 = vshrl.u32 %v104, 7
    %v106 = vsub.s32 1, %v105
    %v107 = vrot.slane %v98, %v106
    %v108 = vlaneseq
    %v109 = vshrl.u32 %v108, 7
    %v110 = vsub.s32 2, %v109
    %v111 = vrot.slane %v98, %v110
    %v112 = vlaneseq
    %v113 = vshrl.u32 %v112, 7
    %v114 = vsub.s32 3, %v113
    %v115 = vrot.slane %v98, %v114
    %v122 = vunpack.c.l.b16 %v88
    %v123 = vunpack.c.l.b16 %v89
    %v124 = vpack.c.b16 %v123, %v122
    %v133 = vunpack.c.l.b16 %v90
    %v134 = vunpack.c.h.b16 %v90
    %v135 = vunpack.c.l.b16 %v91
    %v136 = vunpack.c.h.b16 %v91
    %v137 = vunpack.c.l.b16 %v92
    %v138 = vunpack.c.h.b16 %v92
    %v139 = vunpack.c.l.b16 %v93
    %v140 = vunpack.c.h.b16 %v93
    %v141 = vunpack.c.l.b16 %v94
    %v142 = vunpack.c.h.b16 %v94
    %v143 = vunpack.c.l.b16 %v95
    %v144 = vunpack.c.h.b16 %v95
    %v145 = vunpack.c.l.b16 %v96
    %v146 = vunpack.c.h.b16 %v96
    %v147 = vunpack.c.l.b16 %v97
    %v148 = vunpack.c.h.b16 %v97
    %v149 = vpack.c.b16 %v137, %v133
    %v150 = vpack.c.b16 %v138, %v134
    %v151 = vpack.c.b16 %v139, %v135
    %v152 = vpack.c.b16 %v140, %v136
    %v153 = vpack.c.b16 %v145, %v141
    %v154 = vpack.c.b16 %v146, %v142
    %v155 = vpack.c.b16 %v147, %v143
    %v156 = vpack.c.b16 %v148, %v144
    %vm165 = vcmask 261120
    %v167 = vsel %vm165, %v124, 0
    %169 = vmatprep.subr.bf16.mxu0 %v150
    %170 = vmatpush1.bf16.msra.mxu0 %v149
    %171 = vmatprep.subr.bf16.mxu0 %v154
    %172 = vmatpush1.bf16.msra.mxu0 %v153
    %173 = vmatprep.subr.bf16.mxu0 0
    %174 = vmatpush1.bf16.msra.mxu0 0
    %175 = vmatprep.subr.bf16.mxu0 0
    %176 = vmatpush1.bf16.msra.mxu0 0
    %177 = vmatprep.subr.bf16.mxu0 0
    %178 = vmatpush1.bf16.msra.mxu0 0
    %179 = vmatprep.subr.bf16.mxu0 0
    %180 = vmatpush1.bf16.msra.mxu0 0
    %181 = vmatprep.subr.bf16.mxu0 0
    %182 = vmatpush1.bf16.msra.mxu0 0
    %183 = vmatprep.subr.bf16.mxu0 0
    %184 = vmatpush1.bf16.msra.mxu0 0
    %185 = vmatprep.subr.bf16.mxu0 0
    %186 = vmatpush1.bf16.msra.mxu0 0
    %187 = vmatprep.subr.bf16.mxu0 0
    %188 = vmatpush1.bf16.msra.mxu0 0
    %189 = vmatprep.subr.bf16.mxu0 0
    %190 = vmatpush1.bf16.msra.mxu0 0
    %191 = vmatprep.subr.bf16.mxu0 0
    %192 = vmatpush1.bf16.msra.mxu0 0
    %193 = vmatprep.subr.bf16.mxu0 0
    %194 = vmatpush1.bf16.msra.mxu0 0
    %195 = vmatprep.subr.bf16.mxu0 0
    %196 = vmatpush1.bf16.msra.mxu0 0
    %197 = vmatprep.subr.bf16.mxu0 0
    %198 = vmatpush1.bf16.msra.mxu0 0
    %199 = vmatprep.subr.bf16.mxu0 0
    %200 = vmatpush1.bf16.msra.mxu0 0
    %201 = vmatprep.mubr.bf16.mxu0 0
    %202 = vmatmul.mubr.bf16.gmra.mrb[0].mxu0 %v167
    %v203 = vpop.f32.mrb[0].mxu0
    %v204 = vadd.f32 %v103, %v203
    %v205 = vpop.f32.mrb[0].mxu0
    %v206 = vadd.f32 %v107, %v205
    %v207 = vpop.f32.mrb[0].mxu0
    %v208 = vadd.f32 %v103, %v207
    %v209 = vpop.f32.mrb[0].mxu0
    %v210 = vadd.f32 %v107, %v209
    %211 = vdwg.mxu0
    %212 = vmatprep.subr.bf16.mxu0 %v152
    %213 = vmatpush1.bf16.msra.mxu0 %v151
    %214 = vmatprep.subr.bf16.mxu0 %v156
    %215 = vmatpush1.bf16.msra.mxu0 %v155
    %216 = vmatprep.subr.bf16.mxu0 0
    %217 = vmatpush1.bf16.msra.mxu0 0
    %218 = vmatprep.subr.bf16.mxu0 0
    %219 = vmatpush1.bf16.msra.mxu0 0
    %220 = vmatprep.subr.bf16.mxu0 0
    %221 = vmatpush1.bf16.msra.mxu0 0
    %222 = vmatprep.subr.bf16.mxu0 0
    %223 = vmatpush1.bf16.msra.mxu0 0
    %224 = vmatprep.subr.bf16.mxu0 0
    %225 = vmatpush1.bf16.msra.mxu0 0
    %226 = vmatprep.subr.bf16.mxu0 0
    %227 = vmatpush1.bf16.msra.mxu0 0
    %228 = vmatprep.subr.bf16.mxu0 0
    %229 = vmatpush1.bf16.msra.mxu0 0
    %230 = vmatprep.subr.bf16.mxu0 0
    %231 = vmatpush1.bf16.msra.mxu0 0
    %232 = vmatprep.subr.bf16.mxu0 0
    %233 = vmatpush1.bf16.msra.mxu0 0
    %234 = vmatprep.subr.bf16.mxu0 0
    %235 = vmatpush1.bf16.msra.mxu0 0
    %236 = vmatprep.subr.bf16.mxu0 0
    %237 = vmatpush1.bf16.msra.mxu0 0
    %238 = vmatprep.subr.bf16.mxu0 0
    %239 = vmatpush1.bf16.msra.mxu0 0
    %240 = vmatprep.subr.bf16.mxu0 0
    %241 = vmatpush1.bf16.msra.mxu0 0
    %242 = vmatprep.subr.bf16.mxu0 0
    %243 = vmatpush1.bf16.msra.mxu0 0
    %244 = vmatprep.mubr.bf16.mxu0 0
    %245 = vmatmul.mubr.bf16.gmra.mrb[0].mxu0 %v167
    %v246 = vpop.f32.mrb[0].mxu0
    %v247 = vadd.f32 %v111, %v246
    %v248 = vpop.f32.mrb[0].mxu0
    %v249 = vadd.f32 %v115, %v248
    %v250 = vpop.f32.mrb[0].mxu0
    %v251 = vadd.f32 %v111, %v250
    %v252 = vpop.f32.mrb[0].mxu0
    %v253 = vadd.f32 %v115, %v252
    %254 = vdwg.mxu0
    %v255 = vmax.f32 %v204, 0.0
    %v256 = vmax.f32 %v206, 0.0
    %v257 = vmax.f32 %v247, 0.0
    %v258 = vmax.f32 %v249, 0.0
    %v259 = vmax.f32 %v208, 0.0
    %v260 = vmax.f32 %v210, 0.0
    %v261 = vmax.f32 %v251, 0.0
    %v262 = vmax.f32 %v253, 0.0
    %v263 = vpack.c.bf16 %v259, %v255
    %v264 = vpack.c.bf16 %v260, %v256
    %v265 = vpack.c.bf16 %v261, %v257
    %v266 = vpack.c.bf16 %v262, %v258
    %v267 = vld [vmem:[#allocation8] sm:$0xff]
    %v268 = vld [vmem:[#allocation8 + $0x8] sm:$0xf]
    %v269 = vld [vmem:[#allocation8 + $0xc] sm:$0xff]
    %v270 = vld [vmem:[#allocation8 + $0x14] sm:$0xf]
    %v271 = vld [vmem:[#allocation8 + $0x18] sm:$0xff]
    %v272 = vld [vmem:[#allocation8 + $0x20] sm:$0xf]
    %v273 = vld [vmem:[#allocation8 + $0x24] sm:$0xff]
    %v274 = vld [vmem:[#allocation8 + $0x2c] sm:$0xf]
    %v275 = vld [vmem:[#allocation8 + $0x30] sm:$0xff]
    %v276 = vld [vmem:[#allocation8 + $0x38] sm:$0xf]
    %v277 = vld [vmem:[#allocation8 + $0x3c] sm:$0xff]
    %v278 = vld [vmem:[#allocation8 + $0x44] sm:$0xf]
    %v279 = vld [vmem:[#allocation8 + $0x48] sm:$0xff]
    %v280 = vld [vmem:[#allocation8 + $0x50] sm:$0xf]
    %v281 = vld [vmem:[#allocation8 + $0x54] sm:$0xff]
    %v282 = vld [vmem:[#allocation8 + $0x5c] sm:$0xf]
    %v283 = vld [vmem:[#allocation8 + $0x60] sm:$0xff]
    %v284 = vld [vmem:[#allocation8 + $0x68] sm:$0xf]
    %v285 = vld [vmem:[#allocation8 + $0x6c] sm:$0xff]
    %v286 = vld [vmem:[#allocation8 + $0x74] sm:$0xf]
    %v287 = vld [vmem:[#allocation8 + $0x78] sm:$0xff]
    %v288 = vld [vmem:[#allocation8 + $0x80] sm:$0xf]
    %v289 = vld [vmem:[#allocation8 + $0x84] sm:$0xff]
    %v290 = vld [vmem:[#allocation8 + $0x8c] sm:$0xf]
    %v291 = vld [vmem:[#allocation8 + $0x90] sm:$0xff]
    %v292 = vld [vmem:[#allocation8 + $0x98] sm:$0xf]
    %v293 = vld [vmem:[#allocation8 + $0x9c] sm:$0xff]
    %v294 = vld [vmem:[#allocation8 + $0xa4] sm:$0xf]
    %v295 = vld [vmem:[#allocation8 + $0xa8] sm:$0xff]
    %v296 = vld [vmem:[#allocation8 + $0xb0] sm:$0xf]
    %v297 = vld [vmem:[#allocation8 + $0xb4] sm:$0xff]
    %v298 = vld [vmem:[#allocation8 + $0xbc] sm:$0xf]
    %v299 = vld [vmem:[#allocation8 + $0xc0] sm:$0xff]
    %v300 = vld [vmem:[#allocation8 + $0xc8] sm:$0xf]
    %v301 = vld [vmem:[#allocation8 + $0xcc] sm:$0xff]
    %v302 = vld [vmem:[#allocation8 + $0xd4] sm:$0xf]
    %v303 = vld [vmem:[#allocation8 + $0xd8] sm:$0xff]
    %v304 = vld [vmem:[#allocation8 + $0xe0] sm:$0xf]
    %v305 = vld [vmem:[#allocation8 + $0xe4] sm:$0xff]
    %v306 = vld [vmem:[#allocation8 + $0xec] sm:$0xf]
    %v307 = vld [vmem:[#allocation8 + $0xf0] sm:$0xff]
    %v308 = vld [vmem:[#allocation8 + $0xf8] sm:$0xf]
    %v309 = vld [vmem:[#allocation8 + $0xfc] sm:$0xff]
    %v310 = vld [vmem:[#allocation8 + $0x104] sm:$0xf]
    %v311 = vld [vmem:[#allocation8 + $0x108] sm:$0xff]
    %v312 = vld [vmem:[#allocation8 + $0x110] sm:$0xf]
    %v313 = vld [vmem:[#allocation8 + $0x114] sm:$0xff]
    %v314 = vld [vmem:[#allocation8 + $0x11c] sm:$0xf]
    %v315 = vld [vmem:[#allocation8 + $0x120] sm:$0xff]
    %v316 = vld [vmem:[#allocation8 + $0x128] sm:$0xf]
    %v317 = vld [vmem:[#allocation8 + $0x12c] sm:$0xff]
    %v318 = vld [vmem:[#allocation8 + $0x134] sm:$0xf]
    %v319 = vld [vmem:[#allocation8 + $0x138] sm:$0xff]
    %v320 = vld [vmem:[#allocation8 + $0x140] sm:$0xf]
    %v321 = vld [vmem:[#allocation8 + $0x144] sm:$0xff]
    %v322 = vld [vmem:[#allocation8 + $0x14c] sm:$0xf]
    %v323 = vld [vmem:[#allocation8 + $0x150] sm:$0xff]
    %v324 = vld [vmem:[#allocation8 + $0x158] sm:$0xf]
    %v325 = vld [vmem:[#allocation8 + $0x15c] sm:$0xff]
    %v326 = vld [vmem:[#allocation8 + $0x164] sm:$0xf]
    %v327 = vld [vmem:[#allocation8 + $0x168] sm:$0xff]
    %v328 = vld [vmem:[#allocation8 + $0x170] sm:$0xf]
    %v329 = vld [vmem:[#allocation8 + $0x174] sm:$0xff]
    %v330 = vld [vmem:[#allocation8 + $0x17c] sm:$0xf]
    %v331 = vld [vmem:[#allocation8 + $0x180] sm:$0xff]
    %v332 = vld [vmem:[#allocation8 + $0x188] sm:$0xf]
    %v333 = vld [vmem:[#allocation8 + $0x18c] sm:$0xff]
    %v334 = vld [vmem:[#allocation8 + $0x194] sm:$0xf]
    %v335 = vld [vmem:[#allocation8 + $0x198] sm:$0xff]
    %v336 = vld [vmem:[#allocation8 + $0x1a0] sm:$0xf]
    %v337 = vld [vmem:[#allocation8 + $0x1a4] sm:$0xff]
    %v338 = vld [vmem:[#allocation8 + $0x1ac] sm:$0xf]
    %v339 = vld [vmem:[#allocation8 + $0x1b0] sm:$0xff]
    %v340 = vld [vmem:[#allocation8 + $0x1b8] sm:$0xf]
    %v341 = vld [vmem:[#allocation8 + $0x1bc] sm:$0xff]
    %v342 = vld [vmem:[#allocation8 + $0x1c4] sm:$0xf]
    %v343 = vld [vmem:[#allocation8 + $0x1c8] sm:$0xff]
    %v344 = vld [vmem:[#allocation8 + $0x1d0] sm:$0xf]
    %v345 = vld [vmem:[#allocation8 + $0x1d4] sm:$0xff]
    %v346 = vld [vmem:[#allocation8 + $0x1dc] sm:$0xf]
    %v347 = vld [vmem:[#allocation8 + $0x1e0] sm:$0xff]
    %v348 = vld [vmem:[#allocation8 + $0x1e8] sm:$0xf]
    %v349 = vld [vmem:[#allocation8 + $0x1ec] sm:$0xff]
    %v350 = vld [vmem:[#allocation8 + $0x1f4] sm:$0xf]
    %v351 = vld [vmem:[#allocation8 + $0x1f8] sm:$0xff]
    %v352 = vld [vmem:[#allocation8 + $0x200] sm:$0xf]
    %v353 = vld [vmem:[#allocation8 + $0x204] sm:$0xff]
    %v354 = vld [vmem:[#allocation8 + $0x20c] sm:$0xf]
    %v355 = vld [vmem:[#allocation8 + $0x210] sm:$0xff]
    %v356 = vld [vmem:[#allocation8 + $0x218] sm:$0xf]
    %v357 = vld [vmem:[#allocation8 + $0x21c] sm:$0xff]
    %v358 = vld [vmem:[#allocation8 + $0x224] sm:$0xf]
    %v359 = vld [vmem:[#allocation8 + $0x228] sm:$0xff]
    %v360 = vld [vmem:[#allocation8 + $0x230] sm:$0xf]
    %v361 = vld [vmem:[#allocation8 + $0x234] sm:$0xff]
    %v362 = vld [vmem:[#allocation8 + $0x23c] sm:$0xf]
    %v363 = vld [vmem:[#allocation8 + $0x240] sm:$0xff]
    %v364 = vld [vmem:[#allocation8 + $0x248] sm:$0xf]
    %v365 = vld [vmem:[#allocation8 + $0x24c] sm:$0xff]
    %v366 = vld [vmem:[#allocation8 + $0x254] sm:$0xf]
    %v367 = vld [vmem:[#allocation8 + $0x258] sm:$0xff]
    %v368 = vld [vmem:[#allocation8 + $0x260] sm:$0xf]
    %v369 = vld [vmem:[#allocation8 + $0x264] sm:$0xff]
    %v370 = vld [vmem:[#allocation8 + $0x26c] sm:$0xf]
    %v371 = vld [vmem:[#allocation8 + $0x270] sm:$0xff]
    %v372 = vld [vmem:[#allocation8 + $0x278] sm:$0xf]
    %v373 = vld [vmem:[#allocation8 + $0x27c] sm:$0xff]
    %v374 = vld [vmem:[#allocation8 + $0x284] sm:$0xf]
    %v375 = vld [vmem:[#allocation8 + $0x288] sm:$0xff]
    %v376 = vld [vmem:[#allocation8 + $0x290] sm:$0xf]
    %v377 = vld [vmem:[#allocation8 + $0x294] sm:$0xff]
    %v378 = vld [vmem:[#allocation8 + $0x29c] sm:$0xf]
    %v379 = vld [vmem:[#allocation8 + $0x2a0] sm:$0xff]
    %v380 = vld [vmem:[#allocation8 + $0x2a8] sm:$0xf]
    %v381 = vld [vmem:[#allocation8 + $0x2ac] sm:$0xff]
    %v382 = vld [vmem:[#allocation8 + $0x2b4] sm:$0xf]
    %v383 = vld [vmem:[#allocation8 + $0x2b8] sm:$0xff]
    %v384 = vld [vmem:[#allocation8 + $0x2c0] sm:$0xf]
    %v385 = vld [vmem:[#allocation8 + $0x2c4] sm:$0xff]
    %v386 = vld [vmem:[#allocation8 + $0x2cc] sm:$0xf]
    %v387 = vld [vmem:[#allocation8 + $0x2d0] sm:$0xff]
    %v388 = vld [vmem:[#allocation8 + $0x2d8] sm:$0xf]
    %v389 = vld [vmem:[#allocation8 + $0x2dc] sm:$0xff]
    %v390 = vld [vmem:[#allocation8 + $0x2e4] sm:$0xf]
    %v391 = vld [vmem:[#allocation8 + $0x2e8] sm:$0xff]
    %v392 = vld [vmem:[#allocation8 + $0x2f0] sm:$0xf]
    %v393 = vld [vmem:[#allocation8 + $0x2f4] sm:$0xff]
    %v394 = vld [vmem:[#allocation8 + $0x2fc] sm:$0xf]
    %v395 = vld [vmem:[%s5] sm:$0x7]
    %v397 = vlaneseq
    %v398 = vshrl.u32 %v397, 7
    %v399 = vsub.s32 0, %v398
    %v400 = vrot.slane %v395, %v399
    %v401 = vlaneseq
    %v402 = vshrl.u32 %v401, 7
    %v403 = vsub.s32 1, %v402
    %v404 = vrot.slane %v395, %v403
    %v405 = vlaneseq
    %v406 = vshrl.u32 %v405, 7
    %v407 = vsub.s32 2, %v406
    %v408 = vrot.slane %v395, %v407
    %v540 = vunpack.c.l.b16 %v267
    %v541 = vunpack.c.h.b16 %v267
    %v542 = vunpack.c.l.b16 %v268
    %v543 = vunpack.c.l.b16 %v269
    %v544 = vunpack.c.h.b16 %v269
    %v545 = vunpack.c.l.b16 %v270
    %v546 = vunpack.c.l.b16 %v271
    %v547 = vunpack.c.h.b16 %v271
    %v548 = vunpack.c.l.b16 %v272
    %v549 = vunpack.c.l.b16 %v273
    %v550 = vunpack.c.h.b16 %v273
    %v551 = vunpack.c.l.b16 %v274
    %v552 = vunpack.c.l.b16 %v275
    %v553 = vunpack.c.h.b16 %v275
    %v554 = vunpack.c.l.b16 %v276
    %v555 = vunpack.c.l.b16 %v277
    %v556 = vunpack.c.h.b16 %v277
    %v557 = vunpack.c.l.b16 %v278
    %v558 = vunpack.c.l.b16 %v279
    %v559 = vunpack.c.h.b16 %v279
    %v560 = vunpack.c.l.b16 %v280
    %v561 = vunpack.c.l.b16 %v281
    %v562 = vunpack.c.h.b16 %v281
    %v563 = vunpack.c.l.b16 %v282
    %v564 = vunpack.c.l.b16 %v283
    %v565 = vunpack.c.h.b16 %v283
    %v566 = vunpack.c.l.b16 %v284
    %v567 = vunpack.c.l.b16 %v285
    %v568 = vunpack.c.h.b16 %v285
    %v569 = vunpack.c.l.b16 %v286
    %v570 = vunpack.c.l.b16 %v287
    %v571 = vunpack.c.h.b16 %v287
    %v572 = vunpack.c.l.b16 %v288
    %v573 = vunpack.c.l.b16 %v289
    %v574 = vunpack.c.h.b16 %v289
    %v575 = vunpack.c.l.b16 %v290
    %v576 = vunpack.c.l.b16 %v291
    %v577 = vunpack.c.h.b16 %v291
    %v578 = vunpack.c.l.b16 %v292
    %v579 = vunpack.c.l.b16 %v293
    %v580 = vunpack.c.h.b16 %v293
    %v581 = vunpack.c.l.b16 %v294
    %v582 = vunpack.c.l.b16 %v295
    %v583 = vunpack.c.h.b16 %v295
    %v584 = vunpack.c.l.b16 %v296
    %v585 = vunpack.c.l.b16 %v297
    %v586 = vunpack.c.h.b16 %v297
    %v587 = vunpack.c.l.b16 %v298
    %v588 = vunpack.c.l.b16 %v299
    %v589 = vunpack.c.h.b16 %v299
    %v590 = vunpack.c.l.b16 %v300
    %v591 = vunpack.c.l.b16 %v301
    %v592 = vunpack.c.h.b16 %v301
    %v593 = vunpack.c.l.b16 %v302
    %v594 = vunpack.c.l.b16 %v303
    %v595 = vunpack.c.h.b16 %v303
    %v596 = vunpack.c.l.b16 %v304
    %v597 = vunpack.c.l.b16 %v305
    %v598 = vunpack.c.h.b16 %v305
    %v599 = vunpack.c.l.b16 %v306
    %v600 = vunpack.c.l.b16 %v307
    %v601 = vunpack.c.h.b16 %v307
    %v602 = vunpack.c.l.b16 %v308
    %v603 = vunpack.c.l.b16 %v309
    %v604 = vunpack.c.h.b16 %v309
    %v605 = vunpack.c.l.b16 %v310
    %v606 = vunpack.c.l.b16 %v311
    %v607 = vunpack.c.h.b16 %v311
    %v608 = vunpack.c.l.b16 %v312
    %v609 = vunpack.c.l.b16 %v313
    %v610 = vunpack.c.h.b16 %v313
    %v611 = vunpack.c.l.b16 %v314
    %v612 = vunpack.c.l.b16 %v315
    %v613 = vunpack.c.h.b16 %v315
    %v614 = vunpack.c.l.b16 %v316
    %v615 = vunpack.c.l.b16 %v317
    %v616 = vunpack.c.h.b16 %v317
    %v617 = vunpack.c.l.b16 %v318
    %v618 = vunpack.c.l.b16 %v319
    %v619 = vunpack.c.h.b16 %v319
    %v620 = vunpack.c.l.b16 %v320
    %v621 = vunpack.c.l.b16 %v321
    %v622 = vunpack.c.h.b16 %v321
    %v623 = vunpack.c.l.b16 %v322
    %v624 = vunpack.c.l.b16 %v323
    %v625 = vunpack.c.h.b16 %v323
    %v626 = vunpack.c.l.b16 %v324
    %v627 = vunpack.c.l.b16 %v325
    %v628 = vunpack.c.h.b16 %v325
    %v629 = vunpack.c.l.b16 %v326
    %v630 = vunpack.c.l.b16 %v327
    %v631 = vunpack.c.h.b16 %v327
    %v632 = vunpack.c.l.b16 %v328
    %v633 = vunpack.c.l.b16 %v329
    %v634 = vunpack.c.h.b16 %v329
    %v635 = vunpack.c.l.b16 %v330
    %v636 = vunpack.c.l.b16 %v331
    %v637 = vunpack.c.h.b16 %v331
    %v638 = vunpack.c.l.b16 %v332
    %v639 = vunpack.c.l.b16 %v333
    %v640 = vunpack.c.h.b16 %v333
    %v641 = vunpack.c.l.b16 %v334
    %v642 = vunpack.c.l.b16 %v335
    %v643 = vunpack.c.h.b16 %v335
    %v644 = vunpack.c.l.b16 %v336
    %v645 = vunpack.c.l.b16 %v337
    %v646 = vunpack.c.h.b16 %v337
    %v647 = vunpack.c.l.b16 %v338
    %v648 = vunpack.c.l.b16 %v339
    %v649 = vunpack.c.h.b16 %v339
    %v650 = vunpack.c.l.b16 %v340
    %v651 = vunpack.c.l.b16 %v341
    %v652 = vunpack.c.h.b16 %v341
    %v653 = vunpack.c.l.b16 %v342
    %v654 = vunpack.c.l.b16 %v343
    %v655 = vunpack.c.h.b16 %v343
    %v656 = vunpack.c.l.b16 %v344
    %v657 = vunpack.c.l.b16 %v345
    %v658 = vunpack.c.h.b16 %v345
    %v659 = vunpack.c.l.b16 %v346
    %v660 = vunpack.c.l.b16 %v347
    %v661 = vunpack.c.h.b16 %v347
    %v662 = vunpack.c.l.b16 %v348
    %v663 = vunpack.c.l.b16 %v349
    %v664 = vunpack.c.h.b16 %v349
    %v665 = vunpack.c.l.b16 %v350
    %v666 = vunpack.c.l.b16 %v351
    %v667 = vunpack.c.h.b16 %v351
    %v668 = vunpack.c.l.b16 %v352
    %v669 = vunpack.c.l.b16 %v353
    %v670 = vunpack.c.h.b16 %v353
    %v671 = vunpack.c.l.b16 %v354
    %v672 = vunpack.c.l.b16 %v355
    %v673 = vunpack.c.h.b16 %v355
    %v674 = vunpack.c.l.b16 %v356
    %v675 = vunpack.c.l.b16 %v357
    %v676 = vunpack.c.h.b16 %v357
    %v677 = vunpack.c.l.b16 %v358
    %v678 = vunpack.c.l.b16 %v359
    %v679 = vunpack.c.h.b16 %v359
    %v680 = vunpack.c.l.b16 %v360
    %v681 = vunpack.c.l.b16 %v361
    %v682 = vunpack.c.h.b16 %v361
    %v683 = vunpack.c.l.b16 %v362
    %v684 = vunpack.c.l.b16 %v363
    %v685 = vunpack.c.h.b16 %v363
    %v686 = vunpack.c.l.b16 %v364
    %v687 = vunpack.c.l.b16 %v365
    %v688 = vunpack.c.h.b16 %v365
    %v689 = vunpack.c.l.b16 %v366
    %v690 = vunpack.c.l.b16 %v367
    %v691 = vunpack.c.h.b16 %v367
    %v692 = vunpack.c.l.b16 %v368
    %v693 = vunpack.c.l.b16 %v369
    %v694 = vunpack.c.h.b16 %v369
    %v695 = vunpack.c.l.b16 %v370
    %v696 = vunpack.c.l.b16 %v371
    %v697 = vunpack.c.h.b16 %v371
    %v698 = vunpack.c.l.b16 %v372
    %v699 = vunpack.c.l.b16 %v373
    %v700 = vunpack.c.h.b16 %v373
    %v701 = vunpack.c.l.b16 %v374
    %v702 = vunpack.c.l.b16 %v375
    %v703 = vunpack.c.h.b16 %v375
    %v704 = vunpack.c.l.b16 %v376
    %v705 = vunpack.c.l.b16 %v377
    %v706 = vunpack.c.h.b16 %v377
    %v707 = vunpack.c.l.b16 %v378
    %v708 = vunpack.c.l.b16 %v379
    %v709 = vunpack.c.h.b16 %v379
    %v710 = vunpack.c.l.b16 %v380
    %v711 = vunpack.c.l.b16 %v381
    %v712 = vunpack.c.h.b16 %v381
    %v713 = vunpack.c.l.b16 %v382
    %v714 = vunpack.c.l.b16 %v383
    %v715 = vunpack.c.h.b16 %v383
    %v716 = vunpack.c.l.b16 %v384
    %v717 = vunpack.c.l.b16 %v385
    %v718 = vunpack.c.h.b16 %v385
    %v719 = vunpack.c.l.b16 %v386
    %v720 = vunpack.c.l.b16 %v387
    %v721 = vunpack.c.h.b16 %v387
    %v722 = vunpack.c.l.b16 %v388
    %v723 = vunpack.c.l.b16 %v389
    %v724 = vunpack.c.h.b16 %v389
    %v725 = vunpack.c.l.b16 %v390
    %v726 = vunpack.c.l.b16 %v391
    %v727 = vunpack.c.h.b16 %v391
    %v728 = vunpack.c.l.b16 %v392
    %v729 = vunpack.c.l.b16 %v393
    %v730 = vunpack.c.h.b16 %v393
    %v731 = vunpack.c.l.b16 %v394
    %v732 = vpack.c.b16 %v543, %v540
    %v733 = vpack.c.b16 %v544, %v541
    %v734 = vpack.c.b16 %v545, %v542
    %v735 = vpack.c.b16 %v549, %v546
    %v736 = vpack.c.b16 %v550, %v547
    %v737 = vpack.c.b16 %v551, %v548
    %v738 = vpack.c.b16 %v555, %v552
    %v739 = vpack.c.b16 %v556, %v553
    %v740 = vpack.c.b16 %v557, %v554
    %v741 = vpack.c.b16 %v561, %v558
    %v742 = vpack.c.b16 %v562, %v559
    %v743 = vpack.c.b16 %v563, %v560
    %v744 = vpack.c.b16 %v567, %v564
    %v745 = vpack.c.b16 %v568, %v565
    %v746 = vpack.c.b16 %v569, %v566
    %v747 = vpack.c.b16 %v573, %v570
    %v748 = vpack.c.b16 %v574, %v571
    %v749 = vpack.c.b16 %v575, %v572
    %v750 = vpack.c.b16 %v579, %v576
    %v751 = vpack.c.b16 %v580, %v577
    %v752 = vpack.c.b16 %v581, %v578
    %v753 = vpack.c.b16 %v585, %v582
    %v754 = vpack.c.b16 %v586, %v583
    %v755 = vpack.c.b16 %v587, %v584
    %v756 = vpack.c.b16 %v591, %v588
    %v757 = vpack.c.b16 %v592, %v589
    %v758 = vpack.c.b16 %v593, %v590
    %v759 = vpack.c.b16 %v597, %v594
    %v760 = vpack.c.b16 %v598, %v595
    %v761 = vpack.c.b16 %v599, %v596
    %v762 = vpack.c.b16 %v603, %v600
    %v763 = vpack.c.b16 %v604, %v601
    %v764 = vpack.c.b16 %v605, %v602
    %v765 = vpack.c.b16 %v609, %v606
    %v766 = vpack.c.b16 %v610, %v607
    %v767 = vpack.c.b16 %v611, %v608
    %v768 = vpack.c.b16 %v615, %v612
    %v769 = vpack.c.b16 %v616, %v613
    %v770 = vpack.c.b16 %v617, %v614
    %v771 = vpack.c.b16 %v621, %v618
    %v772 = vpack.c.b16 %v622, %v619
    %v773 = vpack.c.b16 %v623, %v620
    %v774 = vpack.c.b16 %v627, %v624
    %v775 = vpack.c.b16 %v628, %v625
    %v776 = vpack.c.b16 %v629, %v626
    %v777 = vpack.c.b16 %v633, %v630
    %v778 = vpack.c.b16 %v634, %v631
    %v779 = vpack.c.b16 %v635, %v632
    %v780 = vpack.c.b16 %v639, %v636
    %v781 = vpack.c.b16 %v640, %v637
    %v782 = vpack.c.b16 %v641, %v638
    %v783 = vpack.c.b16 %v645, %v642
    %v784 = vpack.c.b16 %v646, %v643
    %v785 = vpack.c.b16 %v647, %v644
    %v786 = vpack.c.b16 %v651, %v648
    %v787 = vpack.c.b16 %v652, %v649
    %v788 = vpack.c.b16 %v653, %v650
    %v789 = vpack.c.b16 %v657, %v654
    %v790 = vpack.c.b16 %v658, %v655
    %v791 = vpack.c.b16 %v659, %v656
    %v792 = vpack.c.b16 %v663, %v660
    %v793 = vpack.c.b16 %v664, %v661
    %v794 = vpack.c.b16 %v665, %v662
    %v795 = vpack.c.b16 %v669, %v666
    %v796 = vpack.c.b16 %v670, %v667
    %v797 = vpack.c.b16 %v671, %v668
    %v798 = vpack.c.b16 %v675, %v672
    %v799 = vpack.c.b16 %v676, %v673
    %v800 = vpack.c.b16 %v677, %v674
    %v801 = vpack.c.b16 %v681, %v678
    %v802 = vpack.c.b16 %v682, %v679
    %v803 = vpack.c.b16 %v683, %v680
    %v804 = vpack.c.b16 %v687, %v684
    %v805 = vpack.c.b16 %v688, %v685
    %v806 = vpack.c.b16 %v689, %v686
    %v807 = vpack.c.b16 %v693, %v690
    %v808 = vpack.c.b16 %v694, %v691
    %v809 = vpack.c.b16 %v695, %v692
    %v810 = vpack.c.b16 %v699, %v696
    %v811 = vpack.c.b16 %v700, %v697
    %v812 = vpack.c.b16 %v701, %v698
    %v813 = vpack.c.b16 %v705, %v702
    %v814 = vpack.c.b16 %v706, %v703
    %v815 = vpack.c.b16 %v707, %v704
    %v816 = vpack.c.b16 %v711, %v708
    %v817 = vpack.c.b16 %v712, %v709
    %v818 = vpack.c.b16 %v713, %v710
    %v819 = vpack.c.b16 %v717, %v714
    %v820 = vpack.c.b16 %v718, %v715
    %v821 = vpack.c.b16 %v719, %v716
    %v822 = vpack.c.b16 %v723, %v720
    %v823 = vpack.c.b16 %v724, %v721
    %v824 = vpack.c.b16 %v725, %v722
    %v825 = vpack.c.b16 %v729, %v726
    %v826 = vpack.c.b16 %v730, %v727
    %v827 = vpack.c.b16 %v731, %v728
    %924 = vmatprep.subr.bf16.mxu0 %v733
    %925 = vmatpush1.bf16.msra.mxu0 %v732
    %926 = vmatprep.subr.bf16.mxu0 %v736
    %927 = vmatpush1.bf16.msra.mxu0 %v735
    %928 = vmatprep.subr.bf16.mxu0 %v739
    %929 = vmatpush1.bf16.msra.mxu0 %v738
    %930 = vmatprep.subr.bf16.mxu0 %v742
    %931 = vmatpush1.bf16.msra.mxu0 %v741
    %932 = vmatprep.subr.bf16.mxu0 %v745
    %933 = vmatpush1.bf16.msra.mxu0 %v744
    %934 = vmatprep.subr.bf16.mxu0 %v748
    %935 = vmatpush1.bf16.msra.mxu0 %v747
    %936 = vmatprep.subr.bf16.mxu0 %v751
    %937 = vmatpush1.bf16.msra.mxu0 %v750
    %938 = vmatprep.subr.bf16.mxu0 %v754
    %939 = vmatpush1.bf16.msra.mxu0 %v753
    %940 = vmatprep.subr.bf16.mxu0 %v757
    %941 = vmatpush1.bf16.msra.mxu0 %v756
    %942 = vmatprep.subr.bf16.mxu0 %v760
    %943 = vmatpush1.bf16.msra.mxu0 %v759
    %944 = vmatprep.subr.bf16.mxu0 %v763
    %945 = vmatpush1.bf16.msra.mxu0 %v762
    %946 = vmatprep.subr.bf16.mxu0 %v766
    %947 = vmatpush1.bf16.msra.mxu0 %v765
    %948 = vmatprep.subr.bf16.mxu0 %v769
    %949 = vmatpush1.bf16.msra.mxu0 %v768
    %950 = vmatprep.subr.bf16.mxu0 %v772
    %951 = vmatpush1.bf16.msra.mxu0 %v771
    %952 = vmatprep.subr.bf16.mxu0 %v775
    %953 = vmatpush1.bf16.msra.mxu0 %v774
    %954 = vmatprep.subr.bf16.mxu0 %v778
    %955 = vmatpush1.bf16.msra.mxu0 %v777
    %956 = vmatprep.mubr.bf16.mxu0 %v264
    %957 = vmatmul.mubr.bf16.gmra.mrb[0].mxu0 %v263
    %v958 = vpop.f32.mrb[0].mxu0
    %v959 = vadd.f32 %v400, %v958
    %v960 = vpop.f32.mrb[0].mxu0
    %v961 = vadd.f32 %v404, %v960
    %v962 = vpop.f32.mrb[0].mxu0
    %v963 = vadd.f32 %v400, %v962
    %v964 = vpop.f32.mrb[0].mxu0
    %v965 = vadd.f32 %v404, %v964
    %966 = vdwg.mxu0
    %967 = vmatprep.subr.bf16.mxu0 %v781
    %968 = vmatpush1.bf16.msra.mxu0 %v780
    %969 = vmatprep.subr.bf16.mxu0 %v784
    %970 = vmatpush1.bf16.msra.mxu0 %v783
    %971 = vmatprep.subr.bf16.mxu0 %v787
    %972 = vmatpush1.bf16.msra.mxu0 %v786
    %973 = vmatprep.subr.bf16.mxu0 %v790
    %974 = vmatpush1.bf16.msra.mxu0 %v789
    %975 = vmatprep.subr.bf16.mxu0 %v793
    %976 = vmatpush1.bf16.msra.mxu0 %v792
    %977 = vmatprep.subr.bf16.mxu0 %v796
    %978 = vmatpush1.bf16.msra.mxu0 %v795
    %979 = vmatprep.subr.bf16.mxu0 %v799
    %980 = vmatpush1.bf16.msra.mxu0 %v798
    %981 = vmatprep.subr.bf16.mxu0 %v802
    %982 = vmatpush1.bf16.msra.mxu0 %v801
    %983 = vmatprep.subr.bf16.mxu0 %v805
    %984 = vmatpush1.bf16.msra.mxu0 %v804
    %985 = vmatprep.subr.bf16.mxu0 %v808
    %986 = vmatpush1.bf16.msra.mxu0 %v807
    %987 = vmatprep.subr.bf16.mxu0 %v811
    %988 = vmatpush1.bf16.msra.mxu0 %v810
    %989 = vmatprep.subr.bf16.mxu0 %v814
    %990 = vmatpush1.bf16.msra.mxu0 %v813
    %991 = vmatprep.subr.bf16.mxu0 %v817
    %992 = vmatpush1.bf16.msra.mxu0 %v816
    %993 = vmatprep.subr.bf16.mxu0 %v820
    %994 = vmatpush1.bf16.msra.mxu0 %v819
    %995 = vmatprep.subr.bf16.mxu0 %v823
    %996 = vmatpush1.bf16.msra.mxu0 %v822
    %997 = vmatprep.subr.bf16.mxu0 %v826
    %998 = vmatpush1.bf16.msra.mxu0 %v825
    %999 = vmatprep.mubr.bf16.mxu0 %v266
    %1000 = vmatmul.mubr.bf16.gmra.mrb[0].mxu0 %v265
    %v1001 = vpop.f32.mrb[0].mxu0
    %v1002 = vadd.f32 %v959, %v1001
    %v1003 = vpop.f32.mrb[0].mxu0
    %v1004 = vadd.f32 %v961, %v1003
    %v1005 = vpop.f32.mrb[0].mxu0
    %v1006 = vadd.f32 %v963, %v1005
    %v1007 = vpop.f32.mrb[0].mxu0
    %v1008 = vadd.f32 %v965, %v1007
    %1009 = vdwg.mxu0
    %1010 = vmatprep.subr.bf16.mxu0 0
    %1011 = vmatpush1.bf16.msra.mxu0 %v734
    %1012 = vmatprep.subr.bf16.mxu0 0
    %1013 = vmatpush1.bf16.msra.mxu0 %v737
    %1014 = vmatprep.subr.bf16.mxu0 0
    %1015 = vmatpush1.bf16.msra.mxu0 %v740
    %1016 = vmatprep.subr.bf16.mxu0 0
    %1017 = vmatpush1.bf16.msra.mxu0 %v743
    %1018 = vmatprep.subr.bf16.mxu0 0
    %1019 = vmatpush1.bf16.msra.mxu0 %v746
    %1020 = vmatprep.subr.bf16.mxu0 0
    %1021 = vmatpush1.bf16.msra.mxu0 %v749
    %1022 = vmatprep.subr.bf16.mxu0 0
    %1023 = vmatpush1.bf16.msra.mxu0 %v752
    %1024 = vmatprep.subr.bf16.mxu0 0
    %1025 = vmatpush1.bf16.msra.mxu0 %v755
    %1026 = vmatprep.subr.bf16.mxu0 0
    %1027 = vmatpush1.bf16.msra.mxu0 %v758
    %1028 = vmatprep.subr.bf16.mxu0 0
    %1029 = vmatpush1.bf16.msra.mxu0 %v761
    %1030 = vmatprep.subr.bf16.mxu0 0
    %1031 = vmatpush1.bf16.msra.mxu0 %v764
    %1032 = vmatprep.subr.bf16.mxu0 0
    %1033 = vmatpush1.bf16.msra.mxu0 %v767
    %1034 = vmatprep.subr.bf16.mxu0 0
    %1035 = vmatpush1.bf16.msra.mxu0 %v770
    %1036 = vmatprep.subr.bf16.mxu0 0
    %1037 = vmatpush1.bf16.msra.mxu0 %v773
    %1038 = vmatprep.subr.bf16.mxu0 0
    %1039 = vmatpush1.bf16.msra.mxu0 %v776
    %1040 = vmatprep.subr.bf16.mxu0 0
    %1041 = vmatpush1.bf16.msra.mxu0 %v779
    %1042 = vmatprep.mubr.bf16.mxu0 %v264
    %1043 = vmatmul.mubr.bf16.gmra.mrb[0].mxu0 %v263
    %v1044 = vpop.f32.mrb[0].mxu0
    %v1045 = vadd.f32 %v408, %v1044
    %v1046 = vpop.f32.mrb[0].mxu0
    %v1047 = vpop.f32.mrb[0].mxu0
    %v1048 = vadd.f32 %v408, %v1047
    %v1049 = vpop.f32.mrb[0].mxu0
    %1050 = vdwg.mxu0
    %1051 = vmatprep.subr.bf16.mxu0 0
    %1052 = vmatpush1.bf16.msra.mxu0 %v782
    %1053 = vmatprep.subr.bf16.mxu0 0
    %1054 = vmatpush1.bf16.msra.mxu0 %v785
    %1055 = vmatprep.subr.bf16.mxu0 0
    %1056 = vmatpush1.bf16.msra.mxu0 %v788
    %1057 = vmatprep.subr.bf16.mxu0 0
    %1058 = vmatpush1.bf16.msra.mxu0 %v791
    %1059 = vmatprep.subr.bf16.mxu0 0
    %1060 = vmatpush1.bf16.msra.mxu0 %v794
    %1061 = vmatprep.subr.bf16.mxu0 0
    %1062 = vmatpush1.bf16.msra.mxu0 %v797
    %1063 = vmatprep.subr.bf16.mxu0 0
    %1064 = vmatpush1.bf16.msra.mxu0 %v800
    %1065 = vmatprep.subr.bf16.mxu0 0
    %1066 = vmatpush1.bf16.msra.mxu0 %v803
    %1067 = vmatprep.subr.bf16.mxu0 0
    %1068 = vmatpush1.bf16.msra.mxu0 %v806
    %1069 = vmatprep.subr.bf16.mxu0 0
    %1070 = vmatpush1.bf16.msra.mxu0 %v809
    %1071 = vmatprep.subr.bf16.mxu0 0
    %1072 = vmatpush1.bf16.msra.mxu0 %v812
    %1073 = vmatprep.subr.bf16.mxu0 0
    %1074 = vmatpush1.bf16.msra.mxu0 %v815
    %1075 = vmatprep.subr.bf16.mxu0 0
    %1076 = vmatpush1.bf16.msra.mxu0 %v818
    %1077 = vmatprep.subr.bf16.mxu0 0
    %1078 = vmatpush1.bf16.msra.mxu0 %v821
    %1079 = vmatprep.subr.bf16.mxu0 0
    %1080 = vmatpush1.bf16.msra.mxu0 %v824
    %1081 = vmatprep.subr.bf16.mxu0 0
    %1082 = vmatpush1.bf16.msra.mxu0 %v827
    %1083 = vmatprep.mubr.bf16.mxu0 %v266
    %1084 = vmatmul.mubr.bf16.gmra.mrb[0].mxu0 %v265
    %v1085 = vpop.f32.mrb[0].mxu0
    %v1086 = vadd.f32 %v1045, %v1085
    %v1087 = vpop.f32.mrb[0].mxu0
    %v1088 = vpop.f32.mrb[0].mxu0
    %v1089 = vadd.f32 %v1048, %v1088
    %v1090 = vpop.f32.mrb[0].mxu0
    %1091 = vdwg.mxu0
    %v1092 = vmax.f32 %v1002, 0.0
    %v1093 = vmax.f32 %v1004, 0.0
    %v1094 = vmax.f32 %v1086, 0.0
    %v1095 = vmax.f32 %v1006, 0.0
    %v1096 = vmax.f32 %v1008, 0.0
    %v1097 = vmax.f32 %v1089, 0.0
    %v1098 = vpack.c.bf16 %v1095, %v1092
    %v1099 = vpack.c.bf16 %v1096, %v1093
    %v1100 = vpack.c.bf16 %v1097, %v1094
    %v1101 = vld [vmem:[#allocation9] sm:$0xf]
    %v1102 = vld [vmem:[#allocation9 + $0x4] sm:$0xf]
    %v1103 = vld [vmem:[#allocation9 + $0x8] sm:$0xf]
    %v1104 = vld [vmem:[#allocation9 + $0xc] sm:$0xf]
    %v1105 = vld [vmem:[#allocation9 + $0x10] sm:$0xf]
    %v1106 = vld [vmem:[#allocation9 + $0x14] sm:$0xf]
    %v1107 = vld [vmem:[#allocation9 + $0x18] sm:$0xf]
    %v1108 = vld [vmem:[#allocation9 + $0x1c] sm:$0xf]
    %v1109 = vld [vmem:[#allocation9 + $0x20] sm:$0xf]
    %v1110 = vld [vmem:[#allocation9 + $0x24] sm:$0xf]
    %v1111 = vld [vmem:[#allocation9 + $0x28] sm:$0xf]
    %v1112 = vld [vmem:[#allocation9 + $0x2c] sm:$0xf]
    %v1113 = vld [vmem:[#allocation9 + $0x30] sm:$0xf]
    %v1114 = vld [vmem:[#allocation9 + $0x34] sm:$0xf]
    %v1115 = vld [vmem:[#allocation9 + $0x38] sm:$0xf]
    %v1116 = vld [vmem:[#allocation9 + $0x3c] sm:$0xf]
    %v1117 = vld [vmem:[#allocation9 + $0x40] sm:$0xf]
    %v1118 = vld [vmem:[#allocation9 + $0x44] sm:$0xf]
    %v1119 = vld [vmem:[#allocation9 + $0x48] sm:$0xf]
    %v1120 = vld [vmem:[#allocation9 + $0x4c] sm:$0xf]
    %v1121 = vld [vmem:[#allocation9 + $0x50] sm:$0xf]
    %v1122 = vld [vmem:[#allocation9 + $0x54] sm:$0xf]
    %v1123 = vld [vmem:[#allocation9 + $0x58] sm:$0xf]
    %v1124 = vld [vmem:[#allocation9 + $0x5c] sm:$0xf]
    %v1125 = vld [vmem:[#allocation9 + $0x60] sm:$0xf]
    %v1126 = vld [vmem:[#allocation9 + $0x64] sm:$0xf]
    %v1127 = vld [vmem:[#allocation9 + $0x68] sm:$0xf]
    %v1128 = vld [vmem:[#allocation9 + $0x6c] sm:$0xf]
    %v1129 = vld [vmem:[#allocation9 + $0x70] sm:$0xf]
    %v1130 = vld [vmem:[#allocation9 + $0x74] sm:$0xf]
    %v1131 = vld [vmem:[#allocation9 + $0x78] sm:$0xf]
    %v1132 = vld [vmem:[#allocation9 + $0x7c] sm:$0xf]
    %v1133 = vld [vmem:[#allocation9 + $0x80] sm:$0xf]
    %v1134 = vld [vmem:[#allocation9 + $0x84] sm:$0xf]
    %v1135 = vld [vmem:[#allocation9 + $0x88] sm:$0xf]
    %v1136 = vld [vmem:[#allocation9 + $0x8c] sm:$0xf]
    %v1137 = vld [vmem:[#allocation9 + $0x90] sm:$0xf]
    %v1138 = vld [vmem:[#allocation9 + $0x94] sm:$0xf]
    %v1139 = vld [vmem:[#allocation9 + $0x98] sm:$0xf]
    %v1140 = vld [vmem:[#allocation9 + $0x9c] sm:$0xf]
    %v1141 = vld [vmem:[#allocation9 + $0xa0] sm:$0xf]
    %v1142 = vld [vmem:[#allocation9 + $0xa4] sm:$0xf]
    %v1143 = vld [vmem:[#allocation9 + $0xa8] sm:$0xf]
    %v1144 = vld [vmem:[#allocation9 + $0xac] sm:$0xf]
    %v1145 = vld [vmem:[#allocation9 + $0xb0] sm:$0xf]
    %v1146 = vld [vmem:[#allocation9 + $0xb4] sm:$0xf]
    %v1147 = vld [vmem:[#allocation9 + $0xb8] sm:$0xf]
    %v1148 = vld [vmem:[#allocation9 + $0xbc] sm:$0xf]
    %v1149 = vld [vmem:[%s7] sm:$0x1]
    %v1151 = vlaneseq
    %v1152 = vshrl.u32 %v1151, 7
    %v1153 = vsub.s32 0, %v1152
    %v1154 = vrot.slane %v1149, %v1153
    %v1204 = vunpack.c.l.b16 %v1101
    %v1205 = vunpack.c.l.b16 %v1102
    %v1206 = vunpack.c.l.b16 %v1103
    %v1207 = vunpack.c.l.b16 %v1104
    %v1208 = vunpack.c.l.b16 %v1105
    %v1209 = vunpack.c.l.b16 %v1106
    %v1210 = vunpack.c.l.b16 %v1107
    %v1211 = vunpack.c.l.b16 %v1108
    %v1212 = vunpack.c.l.b16 %v1109
    %v1213 = vunpack.c.l.b16 %v1110
    %v1214 = vunpack.c.l.b16 %v1111
    %v1215 = vunpack.c.l.b16 %v1112
    %v1216 = vunpack.c.l.b16 %v1113
    %v1217 = vunpack.c.l.b16 %v1114
    %v1218 = vunpack.c.l.b16 %v1115
    %v1219 = vunpack.c.l.b16 %v1116
    %v1220 = vunpack.c.l.b16 %v1117
    %v1221 = vunpack.c.l.b16 %v1118
    %v1222 = vunpack.c.l.b16 %v1119
    %v1223 = vunpack.c.l.b16 %v1120
    %v1224 = vunpack.c.l.b16 %v1121
    %v1225 = vunpack.c.l.b16 %v1122
    %v1226 = vunpack.c.l.b16 %v1123
    %v1227 = vunpack.c.l.b16 %v1124
    %v1228 = vunpack.c.l.b16 %v1125
    %v1229 = vunpack.c.l.b16 %v1126
    %v1230 = vunpack.c.l.b16 %v1127
    %v1231 = vunpack.c.l.b16 %v1128
    %v1232 = vunpack.c.l.b16 %v1129
    %v1233 = vunpack.c.l.b16 %v1130
    %v1234 = vunpack.c.l.b16 %v1131
    %v1235 = vunpack.c.l.b16 %v1132
    %v1236 = vunpack.c.l.b16 %v1133
    %v1237 = vunpack.c.l.b16 %v1134
    %v1238 = vunpack.c.l.b16 %v1135
    %v1239 = vunpack.c.l.b16 %v1136
    %v1240 = vunpack.c.l.b16 %v1137
    %v1241 = vunpack.c.l.b16 %v1138
    %v1242 = vunpack.c.l.b16 %v1139
    %v1243 = vunpack.c.l.b16 %v1140
    %v1244 = vunpack.c.l.b16 %v1141
    %v1245 = vunpack.c.l.b16 %v1142
    %v1246 = vunpack.c.l.b16 %v1143
    %v1247 = vunpack.c.l.b16 %v1144
    %v1248 = vunpack.c.l.b16 %v1145
    %v1249 = vunpack.c.l.b16 %v1146
    %v1250 = vunpack.c.l.b16 %v1147
    %v1251 = vunpack.c.l.b16 %v1148
    %v1252 = vpack.c.b16 %v1205, %v1204
    %v1253 = vpack.c.b16 %v1207, %v1206
    %v1254 = vpack.c.b16 %v1209, %v1208
    %v1255 = vpack.c.b16 %v1211, %v1210
    %v1256 = vpack.c.b16 %v1213, %v1212
    %v1257 = vpack.c.b16 %v1215, %v1214
    %v1258 = vpack.c.b16 %v1217, %v1216
    %v1259 = vpack.c.b16 %v1219, %v1218
    %v1260 = vpack.c.b16 %v1221, %v1220
    %v1261 = vpack.c.b16 %v1223, %v1222
    %v1262 = vpack.c.b16 %v1225, %v1224
    %v1263 = vpack.c.b16 %v1227, %v1226
    %v1264 = vpack.c.b16 %v1229, %v1228
    %v1265 = vpack.c.b16 %v1231, %v1230
    %v1266 = vpack.c.b16 %v1233, %v1232
    %v1267 = vpack.c.b16 %v1235, %v1234
    %v1268 = vpack.c.b16 %v1237, %v1236
    %v1269 = vpack.c.b16 %v1239, %v1238
    %v1270 = vpack.c.b16 %v1241, %v1240
    %v1271 = vpack.c.b16 %v1243, %v1242
    %v1272 = vpack.c.b16 %v1245, %v1244
    %v1273 = vpack.c.b16 %v1247, %v1246
    %v1274 = vpack.c.b16 %v1249, %v1248
    %v1275 = vpack.c.b16 %v1251, %v1250
    %1300 = vmatprep.subr.bf16.mxu0 0
    %1301 = vmatpush1.bf16.msra.mxu0 %v1252
    %1302 = vmatprep.subr.bf16.mxu0 0
    %1303 = vmatpush1.bf16.msra.mxu0 %v1253
    %1304 = vmatprep.subr.bf16.mxu0 0
    %1305 = vmatpush1.bf16.msra.mxu0 %v1254
    %1306 = vmatprep.subr.bf16.mxu0 0
    %1307 = vmatpush1.bf16.msra.mxu0 %v1255
    %1308 = vmatprep.subr.bf16.mxu0 0
    %1309 = vmatpush1.bf16.msra.mxu0 %v1256
    %1310 = vmatprep.subr.bf16.mxu0 0
    %1311 = vmatpush1.bf16.msra.mxu0 %v1257
    %1312 = vmatprep.subr.bf16.mxu0 0
    %1313 = vmatpush1.bf16.msra.mxu0 %v1258
    %1314 = vmatprep.subr.bf16.mxu0 0
    %1315 = vmatpush1.bf16.msra.mxu0 %v1259
    %1316 = vmatprep.subr.bf16.mxu0 0
    %1317 = vmatpush1.bf16.msra.mxu0 %v1260
    %1318 = vmatprep.subr.bf16.mxu0 0
    %1319 = vmatpush1.bf16.msra.mxu0 %v1261
    %1320 = vmatprep.subr.bf16.mxu0 0
    %1321 = vmatpush1.bf16.msra.mxu0 %v1262
    %1322 = vmatprep.subr.bf16.mxu0 0
    %1323 = vmatpush1.bf16.msra.mxu0 %v1263
    %1324 = vmatprep.subr.bf16.mxu0 0
    %1325 = vmatpush1.bf16.msra.mxu0 %v1264
    %1326 = vmatprep.subr.bf16.mxu0 0
    %1327 = vmatpush1.bf16.msra.mxu0 %v1265
    %1328 = vmatprep.subr.bf16.mxu0 0
    %1329 = vmatpush1.bf16.msra.mxu0 %v1266
    %1330 = vmatprep.subr.bf16.mxu0 0
    %1331 = vmatpush1.bf16.msra.mxu0 %v1267
    %1332 = vmatprep.mubr.bf16.mxu0 %v1099
    %1333 = vmatmul.mubr.bf16.gmra.mrb[0].mxu0 %v1098
    %v1334 = vpop.f32.mrb[0].mxu0
    %v1335 = vadd.f32 %v1154, %v1334
    %v1336 = vpop.f32.mrb[0].mxu0
    %v1337 = vpop.f32.mrb[0].mxu0
    %v1338 = vadd.f32 %v1154, %v1337
    %v1339 = vpop.f32.mrb[0].mxu0
    %1340 = vdwg.mxu0
    %1341 = vmatprep.subr.bf16.mxu0 0
    %1342 = vmatpush1.bf16.msra.mxu0 %v1268
    %1343 = vmatprep.subr.bf16.mxu0 0
    %1344 = vmatpush1.bf16.msra.mxu0 %v1269
    %1345 = vmatprep.subr.bf16.mxu0 0
    %1346 = vmatpush1.bf16.msra.mxu0 %v1270
    %1347 = vmatprep.subr.bf16.mxu0 0
    %1348 = vmatpush1.bf16.msra.mxu0 %v1271
    %1349 = vmatprep.subr.bf16.mxu0 0
    %1350 = vmatpush1.bf16.msra.mxu0 %v1272
    %1351 = vmatprep.subr.bf16.mxu0 0
    %1352 = vmatpush1.bf16.msra.mxu0 %v1273
    %1353 = vmatprep.subr.bf16.mxu0 0
    %1354 = vmatpush1.bf16.msra.mxu0 %v1274
    %1355 = vmatprep.subr.bf16.mxu0 0
    %1356 = vmatpush1.bf16.msra.mxu0 %v1275
    %1357 = vmatprep.subr.bf16.mxu0 0
    %1358 = vmatpush1.bf16.msra.mxu0 0
    %1359 = vmatprep.subr.bf16.mxu0 0
    %1360 = vmatpush1.bf16.msra.mxu0 0
    %1361 = vmatprep.subr.bf16.mxu0 0
    %1362 = vmatpush1.bf16.msra.mxu0 0
    %1363 = vmatprep.subr.bf16.mxu0 0
    %1364 = vmatpush1.bf16.msra.mxu0 0
    %1365 = vmatprep.subr.bf16.mxu0 0
    %1366 = vmatpush1.bf16.msra.mxu0 0
    %1367 = vmatprep.subr.bf16.mxu0 0
    %1368 = vmatpush1.bf16.msra.mxu0 0
    %1369 = vmatprep.subr.bf16.mxu0 0
    %1370 = vmatpush1.bf16.msra.mxu0 0
    %1371 = vmatprep.subr.bf16.mxu0 0
    %1372 = vmatpush1.bf16.msra.mxu0 0
    %1373 = vmatprep.mubr.bf16.mxu0 0
    %1374 = vmatmul.mubr.bf16.gmra.mrb[0].mxu0 %v1100
    %v1375 = vpop.f32.mrb[0].mxu0
    %v1376 = vadd.f32 %v1335, %v1375
    %v1377 = vpop.f32.mrb[0].mxu0
    %v1378 = vpop.f32.mrb[0].mxu0
    %v1379 = vadd.f32 %v1338, %v1378
    %v1380 = vpop.f32.mrb[0].mxu0
    %1381 = vdwg.mxu0
    %v1382 = vtanh.pop %v1376
    %v1383 = vtanh.pop %v1379
    %v1384 = vstv %s87
    %v1385 = vmul.f32 %v1382, %v1384
    %v1386 = vmul.f32 %v1383, %v1384
    %1387 = vst [vmem:[#allocation11] sm:$0xff] %v1385
    %1388 = vst [vmem:[#allocation11 + $0x8] sm:$0xff] %v1386
    // Predicated region
    $region50: #{tpu_custom_call.1} parent=1 // pred_check
      _
    $region51: #{tpu_custom_call.1} parent=1 // pred_check_branch
      %1390 = sbr.rel (0) target = $region53
    $region52: #{tpu_custom_call.1} parent=1 // pred_region
      %s1392 = ssub.s32 256, 256
      %1393 = vsyncadd [#allocation5], %s1392
      %s1394 = sshll.u32 [#allocation11], 4
      %s1395 = int_to_ptr.vmem [resolvable:$true] %s1394
      %1400 = dma.vmem_to_hbm [thread:$0]  %s1395, 256, %s8, [#allocation5], 128, 128, 8
    $region53: #{tpu_custom_call.1} parent=1 // pred_fallthru
      _
    // Predicated region
    $region54: #{tpu_custom_call.1} parent=1 // pred_check
      _
    $region55: #{tpu_custom_call.1} parent=1 // pred_check_branch
      %1402 = sbr.rel (0) target = $region57
    $region56: #{tpu_custom_call.1} parent=1 // pred_region
      %1403 = dma.done [#allocation5], 256
    $region57: #{tpu_custom_call.1} parent=1 // pred_fallthru
      _
    %1404 = vsyncpa [#allocation4], 1
    %1405 = vsyncpa [#allocation7], 1
    %1406 = vsyncpa [#allocation10], 1
    %1407 = vsyncpa [#allocation5], 1

</llo_original>
